<compile_context>
chip_gen: v6e
topology: v6e:2x2x1
jax: 0.10.0
libtpu: 0.0.40
codegen_flags: <defaults>
</compile_context>

<pallas_src>
import jax
import jax.numpy as jnp
from jax import lax
from jax.experimental import pallas as pl
from jax.experimental.pallas import tpu as pltpu


_LANES = 128
_SUBLANES = 8
_BLOCK_BYTES_TARGET = 4 * 1024 * 1024   # per-input, per-pipeline-buffer DMA block
_CHUNK_ROWS = 256                        # in-tile accumulation chunk (rows)
_VMEM_LIMIT_BYTES = 32 * 1024 * 1024
_NUM_CORE_SPLITS = 2                     # leading "parallel" axis (v7x megacore)


# ----------------------------- Pallas kernel ------------------------------ #
def _make_fused_kernel(*, tile_rows, chunk_rows, rows_valid, grid_n, inner_n,
                       needs_mask, scale):
    """Kernel computing sum((a-b)^2)*scale and sum(|a-b|)*scale per core.

    Grid is (ncores, inner_n); core axis is 'parallel', inner axis streams the
    row blocks.  Each core writes one lane-dense (8,128) partial-sum block per
    objective; the wrapper sums the partials.
    """
    n_chunks = tile_rows // chunk_rows
    unroll = min(8, n_chunks)

    def kernel(a_ref, b_ref, sq_out, ab_out, acc_sq, acc_ab):
        c = pl.program_id(0)
        i = pl.program_id(1)
        logical = c * inner_n + i          # global block index (may be phantom)

        @pl.when(i == 0)
        def _():
            acc_sq[...] = jnp.zeros_like(acc_sq)
            acc_ab[...] = jnp.zeros_like(acc_ab)

        def chunk_body(masked):
            def body(ci, carry):
                r = pl.multiple_of(ci * chunk_rows, chunk_rows)
                da = a_ref[pl.ds(r, chunk_rows), :].astype(jnp.float32)
                db = b_ref[pl.ds(r, chunk_rows), :].astype(jnp.float32)
                d = da - db
                sq = d * d
                ab = jnp.abs(d)
                if masked:
                    # select (not multiply) so OOB garbage / NaN can't leak in.
                    row = lax.broadcasted_iota(jnp.int32, (chunk_rows, _LANES), 0)
                    row = row + (logical * tile_rows + r)
                    valid = row < rows_valid
                    zero = jnp.float32(0.0)
                    sq = jnp.where(valid, sq, zero)
                    ab = jnp.where(valid, ab, zero)
                # Pure-VPU accumulation into (8,128): fold sublane groups.
                acc_sq[...] += jnp.sum(
                    sq.reshape(chunk_rows // _SUBLANES, _SUBLANES, _LANES), axis=0)
                acc_ab[...] += jnp.sum(
                    ab.reshape(chunk_rows // _SUBLANES, _SUBLANES, _LANES), axis=0)
                return carry
            return body

        if needs_mask:
            # Steady-state blocks: no iota/compare/select work at all.
            @pl.when(logical < grid_n - 1)
            def _():
                lax.fori_loop(0, n_chunks, chunk_body(False), 0, unroll=unroll)

            # Last real block (possibly ragged) and phantom blocks: masked.
            @pl.when(logical >= grid_n - 1)
            def _():
                lax.fori_loop(0, n_chunks, chunk_body(True), 0, unroll=unroll)
        else:
            lax.fori_loop(0, n_chunks, chunk_body(False), 0, unroll=unroll)

        # Flush this core's partials (1/n scale folded in here).
        @pl.when(i == inner_n - 1)
        def _():
            sq_out[...] = acc_sq[...] * scale
            ab_out[...] = acc_ab[...] * scale

    return kernel


# ------------------------------- Wrapper ----------------------------------- #
def _fused_mse_mae(pred: jax.Array, target: jax.Array):
    """Returns (mean((pred-target)^2), mean(|pred-target|)) streaming HBM once."""
    assert pred.shape == target.shape, (pred.shape, target.shape)
    if target.dtype != pred.dtype:
        target = target.astype(pred.dtype)

    n = pred.size
    zero = jnp.float32(0.0)
    if n == 0:
        return zero, zero

    inv_n = 1.0 / float(n)
    itemsize = jnp.dtype(pred.dtype).itemsize
    # Sublane multiple for the native dtype tile: f32 -> 8, bf16 -> 16, i8 -> 32.
    sub = _SUBLANES * max(1, 4 // itemsize)
    align = _LANES * sub

    af = pred.reshape(-1)
    bf = target.reshape(-1)
    main = (n // align) * align

    tail_mse = tail_mae = None
    if main != n:
        # Reduce the small ragged tail (< 128*sub elements) in plain JAX
        # instead of jnp.pad-ing (and copying) the whole flattened inputs.
        td = af[main:].astype(jnp.float32) - bf[main:].astype(jnp.float32)
        tail_mse = jnp.sum(td * td) * inv_n
        tail_mae = jnp.sum(jnp.abs(td)) * inv_n
        if main == 0:
            return tail_mse, tail_mae
        af = af[:main]
        bf = bf[:main]

    rows = main // _LANES                      # multiple of `sub`
    a2 = af.reshape(rows, _LANES)              # free reshape, native dtype
    b2 = bf.reshape(rows, _LANES)

    # Dtype-aware tile sizing by byte budget (~4 MiB / input / buffer).
    target_rows = max(sub, _BLOCK_BYTES_TARGET // (_LANES * itemsize))
    tile_rows = min(target_rows, rows)
    chunk_rows = min(_CHUNK_ROWS, tile_rows)
    tile_rows = max(chunk_rows, (tile_rows // chunk_rows) * chunk_rows)

    grid_n = pl.cdiv(rows, tile_rows)
    ncores = _NUM_CORE_SPLITS if grid_n >= _NUM_CORE_SPLITS else 1
    inner_n = pl.cdiv(grid_n, ncores)
    total_blocks = ncores * inner_n
    needs_mask = (total_blocks * tile_rows) != rows
    last_block = grid_n - 1

    def in_map(c, i):
        # Phantom blocks (odd grid_n split across cores) are clamped to the
        # last real block; they are fully masked in-kernel so the duplicated
        # data contributes exactly zero.
        return (jnp.minimum(c * inner_n + i, last_block), 0)

    kernel = _make_fused_kernel(
        tile_rows=tile_rows, chunk_rows=chunk_rows, rows_valid=rows,
        grid_n=grid_n, inner_n=inner_n, needs_mask=needs_mask, scale=inv_n)

    cost = pl.CostEstimate(
        flops=5 * main,
        transcendentals=0,
        bytes_accessed=2 * main * itemsize + 2 * ncores * _SUBLANES * _LANES * 4)

    sq_parts, ab_parts = pl.pallas_call(
        kernel,
        out_shape=(
            jax.ShapeDtypeStruct((ncores * _SUBLANES, _LANES), jnp.float32),
            jax.ShapeDtypeStruct((ncores * _SUBLANES, _LANES), jnp.float32),
        ),
        grid_spec=pltpu.PrefetchScalarGridSpec(
            num_scalar_prefetch=0,
            grid=(ncores, inner_n),
            in_specs=[
                pl.BlockSpec((tile_rows, _LANES), in_map),
                pl.BlockSpec((tile_rows, _LANES), in_map),
            ],
            out_specs=(
                pl.BlockSpec((_SUBLANES, _LANES), lambda c, i: (c, 0)),
                pl.BlockSpec((_SUBLANES, _LANES), lambda c, i: (c, 0)),
            ),
            scratch_shapes=[
                pltpu.VMEM((_SUBLANES, _LANES), jnp.float32),
                pltpu.VMEM((_SUBLANES, _LANES), jnp.float32),
            ],
        ),
        compiler_params=pltpu.CompilerParams(
            dimension_semantics=("parallel", "arbitrary"),
            vmem_limit_bytes=_VMEM_LIMIT_BYTES,
        ),
        cost_estimate=cost,
    )(a2, b2)

    # Tiny final combine (2*ncores*1024 elements) done by XLA.
    mse = jnp.sum(sq_parts)
    mae = jnp.sum(ab_parts)
    if tail_mse is not None:
        mse = mse + tail_mse
        mae = mae + tail_mae
    return mse, mae


def pallas_mse(pred: jax.Array, target: jax.Array) -> jax.Array:
    return _fused_mse_mae(pred, target)[0]


def pallas_mae(pred: jax.Array, target: jax.Array) -> jax.Array:
    return _fused_mse_mae(pred, target)[1]


# --------------------------- Module translation --------------------------- #
LOSS_REGISTRY = {}


def register_loss(cls):
    LOSS_REGISTRY[cls.__name__] = cls
    return cls


class LossBase:
    """Port of mm_video LossBase: abstract, cfg-holding, no parameters."""

    def __init__(self, cfg=None):
        self.cfg = cfg

    def forward(self, *args, **kwargs):
        # Abstract in the reference; no compute to lower.
        raise NotImplementedError

    def __call__(self, *args, **kwargs):
        return self.forward(*args, **kwargs)


@register_loss
class MSELoss(LossBase):
    """Representative registered sub-loss: scalar MSE via the Pallas kernel."""

    def forward(self, outputs):
        return pallas_mse(outputs["pred"], outputs["target"])


@register_loss
class MAELoss(LossBase):
    """Second representative sub-loss so MultiObjectiveLoss is exercised."""

    def forward(self, outputs):
        return pallas_mae(outputs["pred"], outputs["target"])


_FUSABLE = ("MSELoss", "MAELoss")


class MultiObjectiveLoss(LossBase):
    """Port of MultiObjectiveLoss: dict of {name: sub_loss(outputs) * weight}.

    When both MSELoss and MAELoss are configured, they are served from a
    single fused Pallas kernel call (pred/target streamed from HBM once).
    """

    def __init__(self, cfg):
        super().__init__(cfg)
        mo_cfg = cfg["LOSS"]["MultiObjectiveLoss"]
        self.losses_name = mo_cfg["LOSSES"]
        self.losses = [LOSS_REGISTRY[n](cfg) for n in self.losses_name]
        self.weight = (mo_cfg["WEIGHT"] if mo_cfg["WEIGHT"] is not None
                       else [1] * len(self.losses))

    def forward(self, outputs):
        loss_meta = {}
        fused_vals = {}
        if set(_FUSABLE).issubset(set(self.losses_name)):
            mse, mae = _fused_mse_mae(outputs["pred"], outputs["target"])
            fused_vals = {"MSELoss": mse, "MAELoss": mae}
        for fn, w, name in zip(self.losses, self.weight, self.losses_name):
            if name in fused_vals:
                loss_meta[name] = fused_vals[name] * w
            else:
                loss_meta[name] = fn(outputs) * w
        return loss_meta


# --------------------------------- Main ----------------------------------- #
if __name__ == "__main__":
    root = jax.random.PRNGKey(0)
    k1, k2, k3, k4, k5, k6 = jax.random.split(root, 6)

    # Small video-feature-like shapes: (batch=2, channels=4, H=16, W=16)
    x = jax.random.normal(k1, (2, 4, 16, 16), dtype=jnp.float32)
    y = jax.random.normal(k2, (2, 4, 16, 16), dtype=jnp.float32)
    outputs = {"pred": x, "target": y}

    # Abstract base behaves like the PyTorch reference.
    base = LossBase(cfg=None)
    try:
        base(outputs)
        raise RuntimeError("LossBase.forward should have raised")
    except NotImplementedError:
        pass

    cfg = {
        "LOSS": {
            "MultiObjectiveLoss": {
                "LOSSES": ["MSELoss", "MAELoss"],
                "WEIGHT": [1.0, 0.5],
            }
        }
    }

    loss_mod = MultiObjectiveLoss(cfg)
    loss_meta = loss_mod(outputs)
    jax.block_until_ready(loss_meta)

    # Cross-check against plain JAX references.
    ref_mse = jnp.mean((x - y) ** 2) * 1.0
    ref_mae = jnp.mean(jnp.abs(x - y)) * 0.5
    assert jnp.allclose(loss_meta["MSELoss"], ref_mse, rtol=1e-5, atol=1e-6), (
        loss_meta["MSELoss"], ref_mse)
    assert jnp.allclose(loss_meta["MAELoss"], ref_mae, rtol=1e-5, atol=1e-6), (
        loss_meta["MAELoss"], ref_mae)

    # Ragged shape: exercises the lane-unaligned tail path (no padding copy).
    xr = jax.random.normal(k3, (2, 3, 217), dtype=jnp.float32)
    yr = jax.random.normal(k4, (2, 3, 217), dtype=jnp.float32)
    mse_r, mae_r = _fused_mse_mae(xr, yr)
    jax.block_until_ready((mse_r, mae_r))
    assert jnp.allclose(mse_r, jnp.mean((xr - yr) ** 2), rtol=1e-5, atol=1e-6)
    assert jnp.allclose(mae_r, jnp.mean(jnp.abs(xr - yr)), rtol=1e-5, atol=1e-6)

    # Larger input: exercises multi-block grid, the 2-way core split and the
    # masked ragged / phantom last blocks.
    xl = jax.random.normal(k5, (25, 100, 32, 32), dtype=jnp.float32)
    yl = jax.random.normal(k6, (25, 100, 32, 32), dtype=jnp.float32)
    mse_l, mae_l = _fused_mse_mae(xl, yl)
    jax.block_until_ready((mse_l, mae_l))
    assert jnp.allclose(mse_l, jnp.mean((xl - yl) ** 2), rtol=1e-4, atol=1e-6)
    assert jnp.allclose(mae_l, jnp.mean(jnp.abs(xl - yl)), rtol=1e-4, atol=1e-6)

    print("KERNEL_OK")
</pallas_src>

<mosaic_0001>
module attributes {stable_mosaic.version = 11 : i64} {
  func.func @kernel(%arg0: i32, %arg1: i32, %arg2: memref<16x128xf32, #tpu.memory_space<vmem>>, %arg3: memref<16x128xf32, #tpu.memory_space<vmem>>, %arg4: memref<8x128xf32, #tpu.memory_space<vmem>>, %arg5: memref<8x128xf32, #tpu.memory_space<vmem>>, %arg6: memref<8x128xf32, #tpu.memory_space<vmem>>, %arg7: memref<8x128xf32, #tpu.memory_space<vmem>>) attributes {dimension_semantics = [#tpu.dimension_semantics<parallel>, #tpu.dimension_semantics<arbitrary>], iteration_bounds = array<i64: 1, 1>, scalar_prefetch = 0 : i64, scratch_operands = 2 : i64, tpu.core_type = #tpu.core_type<tc>, window_params = [{transform_indices = @transform_0, window_bounds = array<i64: 16, 128>}, {transform_indices = @transform_1, window_bounds = array<i64: 16, 128>}, {transform_indices = @transform_2, window_bounds = array<i64: 8, 128>}, {transform_indices = @transform_3, window_bounds = array<i64: 8, 128>}]} {
    %c0_i32 = arith.constant 0 : i32
    %0 = arith.cmpi eq, %arg1, %c0_i32 : i32
    %1 = arith.extui %0 : i1 to i32
    %c0_i32_0 = arith.constant 0 : i32
    %2 = arith.cmpi ne, %1, %c0_i32_0 : i32
    scf.if %2 {
      %cst_14 = arith.constant 0.000000e+00 : f32
      %25 = vector.broadcast %cst_14 : f32 to vector<8x128xf32>
      %c0_15 = arith.constant 0 : index
      %c0_16 = arith.constant 0 : index
      %26 = vector.load %arg6[%c0_15, %c0_16] : memref<8x128xf32, #tpu.memory_space<vmem>>, vector<8x128xf32>
      tpu.vector_store %arg6[%c0_15, %c0_16], %25 {strides = array<i32>} : memref<8x128xf32, #tpu.memory_space<vmem>>, vector<8x128xf32>,
      %cst_17 = arith.constant 0.000000e+00 : f32
      %27 = vector.broadcast %cst_17 : f32 to vector<8x128xf32>
      %c0_18 = arith.constant 0 : index
      %c0_19 = arith.constant 0 : index
      %28 = vector.load %arg7[%c0_18, %c0_19] : memref<8x128xf32, #tpu.memory_space<vmem>>, vector<8x128xf32>
      tpu.vector_store %arg7[%c0_18, %c0_19], %27 {strides = array<i32>} : memref<8x128xf32, #tpu.memory_space<vmem>>, vector<8x128xf32>,
    } else {
    }
    %c0_i32_1 = arith.constant 0 : i32
    %c16_i32 = arith.constant 16 : i32
    %3 = arith.muli %c0_i32_1, %c16_i32 : i32
    %4 = tpu.assume_multiple %3, 16 : i32
    %5 = arith.index_cast %4 : i32 to index
    %c0 = arith.constant 0 : index
    %6 = vector.load %arg2[%5, %c0] : memref<16x128xf32, #tpu.memory_space<vmem>>, vector<16x128xf32>
    %7 = arith.index_cast %4 : i32 to index
    %c0_2 = arith.constant 0 : index
    %8 = vector.load %arg3[%7, %c0_2] : memref<16x128xf32, #tpu.memory_space<vmem>>, vector<16x128xf32>
    %9 = arith.subf %6, %8 : vector<16x128xf32>
    %10 = arith.mulf %9, %9 : vector<16x128xf32>
    %11 = math.absf %9 : vector<16x128xf32>
    %c0_3 = arith.constant 0 : index
    %c0_4 = arith.constant 0 : index
    %12 = vector.load %arg6[%c0_3, %c0_4] : memref<8x128xf32, #tpu.memory_space<vmem>>, vector<8x128xf32>
    %13 = vector.shape_cast %10 : vector<16x128xf32> to vector<2x8x128xf32>
    %cst = arith.constant dense<0.000000e+00> : vector<8x128xf32>
    %14 = vector.multi_reduction <add>, %13, %cst [0] : vector<2x8x128xf32> to vector<8x128xf32>
    %15 = arith.addf %12, %14 : vector<8x128xf32>
    %c0_5 = arith.constant 0 : index
    %c0_6 = arith.constant 0 : index
    %16 = vector.load %arg6[%c0_5, %c0_6] : memref<8x128xf32, #tpu.memory_space<vmem>>, vector<8x128xf32>
    tpu.vector_store %arg6[%c0_5, %c0_6], %15 {strides = array<i32>} : memref<8x128xf32, #tpu.memory_space<vmem>>, vector<8x128xf32>,
    %c0_7 = arith.constant 0 : index
    %c0_8 = arith.constant 0 : index
    %17 = vector.load %arg7[%c0_7, %c0_8] : memref<8x128xf32, #tpu.memory_space<vmem>>, vector<8x128xf32>
    %18 = vector.shape_cast %11 : vector<16x128xf32> to vector<2x8x128xf32>
    %cst_9 = arith.constant dense<0.000000e+00> : vector<8x128xf32>
    %19 = vector.multi_reduction <add>, %18, %cst_9 [0] : vector<2x8x128xf32> to vector<8x128xf32>
    %20 = arith.addf %17, %19 : vector<8x128xf32>
    %c0_10 = arith.constant 0 : index
    %c0_11 = arith.constant 0 : index
    %21 = vector.load %arg7[%c0_10, %c0_11] : memref<8x128xf32, #tpu.memory_space<vmem>>, vector<8x128xf32>
    tpu.vector_store %arg7[%c0_10, %c0_11], %20 {strides = array<i32>} : memref<8x128xf32, #tpu.memory_space<vmem>>, vector<8x128xf32>,
    %c1_i32 = arith.constant 1 : i32
    %c0_i32_12 = arith.constant 0 : i32
    %22 = arith.cmpi eq, %arg1, %c0_i32_12 : i32
    %23 = arith.extui %22 : i1 to i32
    %c0_i32_13 = arith.constant 0 : i32
    %24 = arith.cmpi ne, %23, %c0_i32_13 : i32
    scf.if %24 {
      %c0_14 = arith.constant 0 : index
      %c0_15 = arith.constant 0 : index
      %25 = vector.load %arg6[%c0_14, %c0_15] : memref<8x128xf32, #tpu.memory_space<vmem>>, vector<8x128xf32>
      %cst_16 = arith.constant 4.8828125E-4 : f32
      %26 = vector.broadcast %cst_16 : f32 to vector<8x128xf32>
      %27 = arith.mulf %25, %26 : vector<8x128xf32>
      %c0_17 = arith.constant 0 : index
      %c0_18 = arith.constant 0 : index
      %28 = vector.load %arg4[%c0_17, %c0_18] : memref<8x128xf32, #tpu.memory_space<vmem>>, vector<8x128xf32>
      tpu.vector_store %arg4[%c0_17, %c0_18], %27 {strides = array<i32>} : memref<8x128xf32, #tpu.memory_space<vmem>>, vector<8x128xf32>,
      %c0_19 = arith.constant 0 : index
      %c0_20 = arith.constant 0 : index
      %29 = vector.load %arg7[%c0_19, %c0_20] : memref<8x128xf32, #tpu.memory_space<vmem>>, vector<8x128xf32>
      %cst_21 = arith.constant 4.8828125E-4 : f32
      %30 = vector.broadcast %cst_21 : f32 to vector<8x128xf32>
      %31 = arith.mulf %29, %30 : vector<8x128xf32>
      %c0_22 = arith.constant 0 : index
      %c0_23 = arith.constant 0 : index
      %32 = vector.load %arg5[%c0_22, %c0_23] : memref<8x128xf32, #tpu.memory_space<vmem>>, vector<8x128xf32>
      tpu.vector_store %arg5[%c0_22, %c0_23], %31 {strides = array<i32>} : memref<8x128xf32, #tpu.memory_space<vmem>>, vector<8x128xf32>,
    } else {
    }
    return
  }
  func.func @transform_0(%arg0: i32, %arg1: i32) -> (i32, i32) {
    %c1_i32 = arith.constant 1 : i32
    %0 = arith.muli %arg0, %c1_i32 : i32
    %1 = arith.addi %0, %arg1 : i32
    %c0_i32 = arith.constant 0 : i32
    %2 = arith.minsi %1, %c0_i32 : i32
    %c0_i32_0 = arith.constant 0 : i32
    %c0_i32_1 = arith.constant 0 : i32
    return %2, %c0_i32_0 : i32, i32
  }
  func.func @transform_1(%arg0: i32, %arg1: i32) -> (i32, i32) {
    %c1_i32 = arith.constant 1 : i32
    %0 = arith.muli %arg0, %c1_i32 : i32
    %1 = arith.addi %0, %arg1 : i32
    %c0_i32 = arith.constant 0 : i32
    %2 = arith.minsi %1, %c0_i32 : i32
    %c0_i32_0 = arith.constant 0 : i32
    %c0_i32_1 = arith.constant 0 : i32
    return %2, %c0_i32_0 : i32, i32
  }
  func.func @transform_2(%arg0: i32, %arg1: i32) -> (i32, i32) {
    %c0_i32 = arith.constant 0 : i32
    %c0_i32_0 = arith.constant 0 : i32
    return %arg0, %c0_i32 : i32, i32
  }
  func.func @transform_3(%arg0: i32, %arg1: i32) -> (i32, i32) {
    %c0_i32 = arith.constant 0 : i32
    %c0_i32_0 = arith.constant 0 : i32
    return %arg0, %c0_i32 : i32, i32
  }
}

</mosaic_0001>

<llo_original>
// kernel: tpu_custom_call.1
$region0: #{tpu_custom_call.1}
  #allocation0 [shape = 'u32[]', space=smem, size = 0x4, offset = 0x4, fixed_abs, tag = 'smem constant byte address 0x4 - core index']
  #allocation1 [shape = 'u32[144,128]{1,0:T(1,128)}', space=vmem, size = 0x12000, scoped, tag = 'internal scratch']
  #allocation2 [shape = 'f32[8,128]{1,0:T(8,128)}', space=vmem, size = 0x1000, scoped, tag = 'scratch operand']
  #allocation3 [shape = 'f32[8,128]{1,0:T(8,128)}', space=vmem, size = 0x1000, scoped, tag = 'scratch operand']
  %s0 = inlined_call_operand.hbm [shape: f32[16,128], index: 0, kind: input, shape index: {}]
  %s1 = inlined_call_operand.hbm [shape: f32[16,128], index: 1, kind: input, shape index: {}]
  %s2 = inlined_call_operand.hbm [shape: f32[8,128], index: 2, kind: output, shape index: {0}]
  %s3 = inlined_call_operand.hbm [shape: f32[8,128], index: 3, kind: output, shape index: {1}]
  %4 = xla_tuple %s2, %s3
  %s5 = sld [smem:[#allocation0]]
  $region42: #{tpu_custom_call.1} parent=0
    _
  %s7 = ssub.s32 1, %s5
  %s8 = scalar_select 0, %s7, %s5
  $region1: #{tpu_custom_call.1} parent=0
    #allocation4 [shape = 'u8[8192]{0}', space=vmem, size = 0x2000, scoped, tag = 'input window, operand 0, single buffered']
    #allocation5 [shape = 's32[1]{0}', space=sflag, size = 0x4, scoped, tag = 'scoped memory for tpu_custom_call.1']
    #allocation6 [shape = 's32[1]{0}', space=sflag, size = 0x4, scoped, tag = 'scoped memory for tpu_custom_call.1']
    #allocation7 [shape = 'u8[8192]{0}', space=vmem, size = 0x2000, scoped, tag = 'input window, operand 1, single buffered']
    #allocation8 [shape = 's32[1]{0}', space=sflag, size = 0x4, scoped, tag = 'scoped memory for tpu_custom_call.1']
    #allocation9 [shape = 'u8[4096]{0}', space=vmem, size = 0x1000, scoped, tag = 'output window, operand 0, single buffered']
    #allocation10 [shape = 'u8[4096]{0}', space=vmem, size = 0x1000, scoped, tag = 'output window, operand 1, single buffered']
    #allocation11 [shape = 's32[1]{0}', space=sflag, size = 0x4, scoped, tag = 'scoped memory for tpu_custom_call.1']
    %9 = vsyncpa [#allocation5], 0
    %10 = vsyncpa [#allocation8], 0
    %11 = vsyncpa [#allocation6], 0
    %12 = vsyncpa [#allocation11], 0
    // Predicated region
    $region2: #{tpu_custom_call.1} parent=1 // pred_check
      _
    $region3: #{tpu_custom_call.1} parent=1 // pred_check_branch
      %14 = sbr.rel (0) target = $region5
    $region4: #{tpu_custom_call.1} parent=1 // pred_region
      %s15 = sadd.s32 0, 0
      %p16 = scmp.lt.s32.totalorder %s15, 0
      %s17 = scalar_select %p16, %s15, 0
      %s18 = smul.u32 2, %s17
      %s20 = ssub.s32 256, 256
      %21 = vsyncadd [#allocation5], %s20
      %s22 = smul.addr %s18, 128
      %s23 = scalar_lea.hbm %s0, %s22
      %s24 = sshll.u32 [#allocation4], 4
      %s25 = int_to_ptr.vmem [resolvable:$true] %s24
      %30 = dma.hbm_to_vmem [thread:$0]  %s23, 256, %s25, [#allocation5], 128, 128, 8
    $region5: #{tpu_custom_call.1} parent=1 // pred_fallthru
      _
    // Predicated region
    $region6: #{tpu_custom_call.1} parent=1 // pred_check
      _
    $region7: #{tpu_custom_call.1} parent=1 // pred_check_branch
      %32 = sbr.rel (0) target = $region9
    $region8: #{tpu_custom_call.1} parent=1 // pred_region
      %s33 = sadd.s32 0, 0
      %p34 = scmp.lt.s32.totalorder %s33, 0
      %s35 = scalar_select %p34, %s33, 0
      %s36 = smul.u32 2, %s35
      %s38 = ssub.s32 256, 256
      %39 = vsyncadd [#allocation8], %s38
      %s40 = smul.addr %s36, 128
      %s41 = scalar_lea.hbm %s1, %s40
      %s42 = sshll.u32 [#allocation7], 4
      %s43 = int_to_ptr.vmem [resolvable:$true] %s42
      %48 = dma.hbm_to_vmem [thread:$0]  %s41, 256, %s43, [#allocation8], 128, 128, 8
    $region9: #{tpu_custom_call.1} parent=1 // pred_fallthru
      _
    // Predicated region
    $region10: #{tpu_custom_call.1} parent=1 // pred_check
      _
    $region11: #{tpu_custom_call.1} parent=1 // pred_check_branch
      %50 = sbr.rel (0) target = $region13
    $region12: #{tpu_custom_call.1} parent=1 // pred_region
      %51 = dma.done [#allocation5], 256
    $region13: #{tpu_custom_call.1} parent=1 // pred_fallthru
      _
    // Predicated region
    $region14: #{tpu_custom_call.1} parent=1 // pred_check
      _
    $region15: #{tpu_custom_call.1} parent=1 // pred_check_branch
      %53 = sbr.rel (0) target = $region17
    $region16: #{tpu_custom_call.1} parent=1 // pred_region
      %54 = dma.done [#allocation8], 256
    $region17: #{tpu_custom_call.1} parent=1 // pred_fallthru
      _
    %s55 = sadd.s32 0, 0
    %p56 = scmp.lt.s32.totalorder %s55, 0
    %s57 = scalar_select %p56, %s55, 0
    %s58 = smul.u32 2, %s57
    %s59 = sadd.s32 0, 0
    %p60 = scmp.lt.s32.totalorder %s59, 0
    %s61 = scalar_select %p60, %s59, 0
    %s62 = smul.u32 2, %s61
    %p63 = scmp.eq.s32.totalorder 0, 0
    // Predicated region
    $region18: #{tpu_custom_call.1} parent=1 // pred_check
      %p64 = pneg %p63
    $region19: #{tpu_custom_call.1} parent=1 // pred_check_branch
      %66 = sbr.rel (%p64) target = $region21
    $region20: #{tpu_custom_call.1} parent=1 // pred_region
      %67 = vst [vmem:[#allocation2] sm:$0xff] 0.0
      %68 = vst [vmem:[#allocation3] sm:$0xff] 0.0
    $region21: #{tpu_custom_call.1} parent=1 // pred_fallthru
      _
    %v69 = vld [vmem:[#allocation4] sm:$0xff]
    %v70 = vld [vmem:[#allocation4 + $0x8] sm:$0xff]
    %v71 = vld [vmem:[#allocation7] sm:$0xff]
    %v72 = vld [vmem:[#allocation7 + $0x8] sm:$0xff]
    %v73 = vsub.f32 %v69, %v71
    %v74 = vsub.f32 %v70, %v72
    %v75 = vmul.f32 %v73, %v73
    %v76 = vmul.f32 %v74, %v74
    %v77 = vand.u32 2147483647, %v73
    %v78 = vand.u32 2147483647, %v74
    %v79 = vld [vmem:[#allocation2] sm:$0xff]
    %v80 = vadd.f32 %v75, %v76
    %v81 = vadd.f32 %v79, %v80
    %82 = vst [vmem:[#allocation2] sm:$0xff] %v81
    %v83 = vld [vmem:[#allocation3] sm:$0xff]
    %v84 = vadd.f32 %v77, %v78
    %v85 = vadd.f32 %v83, %v84
    %86 = vst [vmem:[#allocation3] sm:$0xff] %v85
    // Predicated region
    $region22: #{tpu_custom_call.1} parent=1 // pred_check
      %p87 = pneg %p63
    $region23: #{tpu_custom_call.1} parent=1 // pred_check_branch
      %89 = sbr.rel (%p87) target = $region25
    $region24: #{tpu_custom_call.1} parent=1 // pred_region
      %v90 = vld [vmem:[#allocation2] sm:$0xff]
      %v91 = vmul.f32 %v90, 0.00048828125
      %92 = vst [vmem:[#allocation9] sm:$0xff] %v91
      %v93 = vld [vmem:[#allocation3] sm:$0xff]
      %v94 = vmul.f32 %v93, 0.00048828125
      %95 = vst [vmem:[#allocation10] sm:$0xff] %v94
    $region25: #{tpu_custom_call.1} parent=1 // pred_fallthru
      _
    // Predicated region
    $region26: #{tpu_custom_call.1} parent=1 // pred_check
      _
    $region27: #{tpu_custom_call.1} parent=1 // pred_check_branch
      %97 = sbr.rel (0) target = $region29
    $region28: #{tpu_custom_call.1} parent=1 // pred_region
      %s99 = ssub.s32 128, 128
      %100 = vsyncadd [#allocation6], %s99
      %s102 = sshll.u32 [#allocation9], 4
      %s103 = int_to_ptr.vmem [resolvable:$true] %s102
      %105 = dma.vmem_to_hbm [thread:$0]  %s103, 128, %s2, [#allocation6]
    $region29: #{tpu_custom_call.1} parent=1 // pred_fallthru
      _
    // Predicated region
    $region30: #{tpu_custom_call.1} parent=1 // pred_check
      _
    $region31: #{tpu_custom_call.1} parent=1 // pred_check_branch
      %107 = sbr.rel (0) target = $region33
    $region32: #{tpu_custom_call.1} parent=1 // pred_region
      %s109 = ssub.s32 128, 128
      %110 = vsyncadd [#allocation11], %s109
      %s112 = sshll.u32 [#allocation10], 4
      %s113 = int_to_ptr.vmem [resolvable:$true] %s112
      %115 = dma.vmem_to_hbm [thread:$0]  %s113, 128, %s3, [#allocation11]
    $region33: #{tpu_custom_call.1} parent=1 // pred_fallthru
      _
    // Predicated region
    $region34: #{tpu_custom_call.1} parent=1 // pred_check
      _
    $region35: #{tpu_custom_call.1} parent=1 // pred_check_branch
      %117 = sbr.rel (0) target = $region37
    $region36: #{tpu_custom_call.1} parent=1 // pred_region
      %118 = dma.done [#allocation6], 128
    $region37: #{tpu_custom_call.1} parent=1 // pred_fallthru
      _
    // Predicated region
    $region38: #{tpu_custom_call.1} parent=1 // pred_check
      _
    $region39: #{tpu_custom_call.1} parent=1 // pred_check_branch
      %120 = sbr.rel (0) target = $region41
    $region40: #{tpu_custom_call.1} parent=1 // pred_region
      %121 = dma.done [#allocation11], 128
    $region41: #{tpu_custom_call.1} parent=1 // pred_fallthru
      _
    %122 = vsyncpa [#allocation5], 1
    %123 = vsyncpa [#allocation8], 1
    %124 = vsyncpa [#allocation6], 1
    %125 = vsyncpa [#allocation11], 1

</llo_original>
